<compile_context>
chip_gen: v6e
topology: v6e:2x2x1
jax: 0.10.0
libtpu: 0.0.40
codegen_flags: <defaults>
</compile_context>

<pallas_src>
import jax
import jax.numpy as jnp
from jax.experimental import pallas as pl
from jax.experimental.pallas import tpu as pltpu


def _adj_msg_agg_kernel(msg_ref, adj_ref, out_ref, acc_ref):
    """One grid step.

    msg_ref: (bT, tI, tJ, tF)  messages tile
    adj_ref: (bT, tI, tJ)      adjacency tile
    out_ref: (bT, tI, tF)      output tile (resident across the N_src axis)
    acc_ref: (bT, tI, tF) f32  VMEM accumulator scratch
    """
    j = pl.program_id(3)

    @pl.when(j == 0)
    def _():
        acc_ref[...] = jnp.zeros_like(acc_ref)

    msg = msg_ref[...].astype(jnp.float32)
    adj = adj_ref[...].astype(jnp.float32)
    # Weighted sum over the source-node axis (VPU multiply + reduce).
    acc_ref[...] += jnp.sum(msg * adj[..., None], axis=2)

    @pl.when(j == pl.num_programs(3) - 1)
    def _():
        out_ref[...] = acc_ref[...].astype(out_ref.dtype)


def _pick_tile(dim, align, cap):
    """Largest t <= cap with t % align == 0 and dim % t == 0; else full dim."""
    if dim % align == 0:
        best = None
        t = align
        while t <= min(dim, cap):
            if dim % t == 0:
                best = t
            t += align
        if best is not None:
            return best
    return dim


def _largest_divisor(n, cap):
    for d in range(max(1, min(n, cap)), 0, -1):
        if n % d == 0:
            return d
    return 1


def adj_msg_agg(messages, adj, *, target_block_bytes=2 * 1024 * 1024):
    """messages: (B, N, N, F), adj: (B, N, N) -> (B, N, F)."""
    B, N, N2, F = messages.shape
    assert N == N2 and adj.shape == (B, N, N)
    msg_bytes = jnp.dtype(messages.dtype).itemsize
    adj_bytes = jnp.dtype(adj.dtype).itemsize

    # --- Tile selection -----------------------------------------------------
    # Feature tile: lane axis of messages/out -> multiple of 128, or full F.
    tF = _pick_tile(F, 128, 512)

    # Source-node (reduction) tile: lane axis of adj -> multiple of 128 or
    # full N. Prefer keeping the whole reduction resident when it fits.
    full_j_bytes = 8 * N * tF * msg_bytes
    if full_j_bytes <= target_block_bytes or N % 128 != 0:
        tJ = N
    else:
        cap_j = max(128, target_block_bytes // (8 * tF * msg_bytes))
        tJ = _pick_tile(N, 128, cap_j)

    # Destination-node tile: sublane axis of adj/out -> multiple of 8 or N.
    cap_i = max(8, target_block_bytes // max(1, tJ * tF * msg_bytes))
    tI = _pick_tile(N, 8, cap_i)

    # Fold batches into one block when the per-batch block is tiny.
    per_block = tI * tJ * tF * msg_bytes
    cap_b = max(1, target_block_bytes // max(1, per_block))
    bT = _largest_divisor(B, cap_b)

    grid = (B // bT, N // tI, F // tF, N // tJ)

    # VMEM budget: 2x(msg + adj + out) blocks + f32 accumulator, with headroom.
    # 48 MiB keeps headroom on v7x (64 MiB physical) and raises v5e/v6e's
    # smaller scoped defaults so large double-buffered tiles stay pipelined.
    vmem_limit = 48 * 1024 * 1024

    cost = pl.CostEstimate(
        flops=2 * B * N * N * F,
        transcendentals=0,
        bytes_accessed=msg_bytes * (B * N * N * F + B * N * F)
        + adj_bytes * (B * N * N),
    )

    return pl.pallas_call(
        _adj_msg_agg_kernel,
        out_shape=jax.ShapeDtypeStruct((B, N, F), messages.dtype),
        grid_spec=pltpu.PrefetchScalarGridSpec(
            num_scalar_prefetch=0,
            grid=grid,
            in_specs=[
                pl.BlockSpec((bT, tI, tJ, tF), lambda b, i, f, j: (b, i, j, f)),
                pl.BlockSpec((bT, tI, tJ), lambda b, i, f, j: (b, i, j)),
            ],
            # Output block index is constant along the reduction axis j.
            out_specs=pl.BlockSpec((bT, tI, tF), lambda b, i, f, j: (b, i, f)),
            scratch_shapes=[pltpu.VMEM((bT, tI, tF), jnp.float32)],
        ),
        compiler_params=pltpu.CompilerParams(
            dimension_semantics=("parallel", "parallel", "parallel", "arbitrary"),
            vmem_limit_bytes=vmem_limit,
        ),
        cost_estimate=cost,
    )(messages, adj)


def adj_msg_agg_ref(messages, adj):
    return jnp.sum(
        messages.astype(jnp.float32) * adj.astype(jnp.float32)[..., None], axis=-2
    ).astype(messages.dtype)


def _run_case(key, B, N, F, **kwargs):
    k1, k2 = jax.random.split(key)
    messages = jax.random.normal(k1, (B, N, N, F), dtype=jnp.float32)
    adj = (jax.random.uniform(k2, (B, N, N)) > 0.5).astype(jnp.float32)
    out = jax.block_until_ready(adj_msg_agg(messages, adj, **kwargs))
    ref = adj_msg_agg_ref(messages, adj)
    assert out.shape == (B, N, F)
    assert jnp.allclose(out, ref, atol=1e-4, rtol=1e-4)


if __name__ == "__main__":
    key = jax.random.PRNGKey(0)
    k1, k2, k3 = jax.random.split(key, 3)

    # Tiny shape (module-sized test): batch folding, single grid step.
    _run_case(k1, B=2, N=8, F=32)

    # Medium shape: N_dst / batch tiling, lane-dense (256-wide) output blocks.
    _run_case(k2, B=2, N=128, F=256)

    # Shape forcing N_src reduction tiling (accumulator across 2 grid steps).
    _run_case(k3, B=1, N=256, F=128, target_block_bytes=512 * 1024)

    print("KERNEL_OK")
</pallas_src>

<mosaic_0001>
module attributes {stable_mosaic.version = 11 : i64} {
  func.func @_adj_msg_agg_kernel(%arg0: i32, %arg1: i32, %arg2: i32, %arg3: i32, %arg4: memref<2x8x8x32xf32, #tpu.memory_space<vmem>>, %arg5: memref<2x8x8xf32, #tpu.memory_space<vmem>>, %arg6: memref<2x8x32xf32, #tpu.memory_space<vmem>>, %arg7: memref<2x8x32xf32, #tpu.memory_space<vmem>>) attributes {dimension_semantics = [#tpu.dimension_semantics<parallel>, #tpu.dimension_semantics<parallel>, #tpu.dimension_semantics<parallel>, #tpu.dimension_semantics<arbitrary>], iteration_bounds = array<i64: 1, 1, 1, 1>, scalar_prefetch = 0 : i64, scratch_operands = 1 : i64, tpu.core_type = #tpu.core_type<tc>, window_params = [{transform_indices = @transform_0, window_bounds = array<i64: 2, 8, 8, 32>}, {transform_indices = @transform_1, window_bounds = array<i64: 2, 8, 8>}, {transform_indices = @transform_2, window_bounds = array<i64: 2, 8, 32>}]} {
    %c0_i32 = arith.constant 0 : i32
    %0 = arith.cmpi eq, %arg3, %c0_i32 : i32
    %1 = arith.extui %0 : i1 to i32
    %c0_i32_0 = arith.constant 0 : i32
    %2 = arith.cmpi ne, %1, %c0_i32_0 : i32
    scf.if %2 {
      %cst_15 = arith.constant 0.000000e+00 : f32
      %15 = vector.broadcast %cst_15 : f32 to vector<2x8x32xf32>
      %c0_16 = arith.constant 0 : index
      %c0_17 = arith.constant 0 : index
      %c0_18 = arith.constant 0 : index
      %16 = vector.load %arg7[%c0_16, %c0_17, %c0_18] : memref<2x8x32xf32, #tpu.memory_space<vmem>>, vector<2x8x32xf32>
      tpu.vector_store %arg7[%c0_16, %c0_17, %c0_18], %15 {strides = array<i32>} : memref<2x8x32xf32, #tpu.memory_space<vmem>>, vector<2x8x32xf32>,
    } else {
    }
    %c0 = arith.constant 0 : index
    %c0_1 = arith.constant 0 : index
    %c0_2 = arith.constant 0 : index
    %c0_3 = arith.constant 0 : index
    %3 = vector.load %arg4[%c0, %c0_1, %c0_2, %c0_3] : memref<2x8x8x32xf32, #tpu.memory_space<vmem>>, vector<2x8x8x32xf32>
    %c0_4 = arith.constant 0 : index
    %c0_5 = arith.constant 0 : index
    %c0_6 = arith.constant 0 : index
    %4 = vector.load %arg5[%c0_4, %c0_5, %c0_6] : memref<2x8x8xf32, #tpu.memory_space<vmem>>, vector<2x8x8xf32>
    %c0_7 = arith.constant 0 : index
    %c0_8 = arith.constant 0 : index
    %c0_9 = arith.constant 0 : index
    %5 = vector.load %arg7[%c0_7, %c0_8, %c0_9] : memref<2x8x32xf32, #tpu.memory_space<vmem>>, vector<2x8x32xf32>
    %6 = vector.shape_cast %4 : vector<2x8x8xf32> to vector<2x8x8x1xf32>
    %7 = vector.broadcast %6 : vector<2x8x8x1xf32> to vector<2x8x8x32xf32>
    %8 = arith.mulf %3, %7 : vector<2x8x8x32xf32>
    %cst = arith.constant dense<0.000000e+00> : vector<2x8x32xf32>
    %9 = vector.multi_reduction <add>, %8, %cst [2] : vector<2x8x8x32xf32> to vector<2x8x32xf32>
    %10 = arith.addf %5, %9 : vector<2x8x32xf32>
    %c0_10 = arith.constant 0 : index
    %c0_11 = arith.constant 0 : index
    %c0_12 = arith.constant 0 : index
    %11 = vector.load %arg7[%c0_10, %c0_11, %c0_12] : memref<2x8x32xf32, #tpu.memory_space<vmem>>, vector<2x8x32xf32>
    tpu.vector_store %arg7[%c0_10, %c0_11, %c0_12], %10 {strides = array<i32>} : memref<2x8x32xf32, #tpu.memory_space<vmem>>, vector<2x8x32xf32>,
    %c0_i32_13 = arith.constant 0 : i32
    %12 = arith.cmpi eq, %arg3, %c0_i32_13 : i32
    %13 = arith.extui %12 : i1 to i32
    %c0_i32_14 = arith.constant 0 : i32
    %14 = arith.cmpi ne, %13, %c0_i32_14 : i32
    scf.if %14 {
      %c0_15 = arith.constant 0 : index
      %c0_16 = arith.constant 0 : index
      %c0_17 = arith.constant 0 : index
      %15 = vector.load %arg7[%c0_15, %c0_16, %c0_17] : memref<2x8x32xf32, #tpu.memory_space<vmem>>, vector<2x8x32xf32>
      %c0_18 = arith.constant 0 : index
      %c0_19 = arith.constant 0 : index
      %c0_20 = arith.constant 0 : index
      %16 = vector.load %arg6[%c0_18, %c0_19, %c0_20] : memref<2x8x32xf32, #tpu.memory_space<vmem>>, vector<2x8x32xf32>
      tpu.vector_store %arg6[%c0_18, %c0_19, %c0_20], %15 {strides = array<i32>} : memref<2x8x32xf32, #tpu.memory_space<vmem>>, vector<2x8x32xf32>,
    } else {
    }
    return
  }
  func.func @transform_0(%arg0: i32, %arg1: i32, %arg2: i32, %arg3: i32) -> (i32, i32, i32, i32) {
    %c0_i32 = arith.constant 0 : i32
    return %arg0, %arg1, %arg3, %arg2 : i32, i32, i32, i32
  }
  func.func @transform_1(%arg0: i32, %arg1: i32, %arg2: i32, %arg3: i32) -> (i32, i32, i32) {
    %c0_i32 = arith.constant 0 : i32
    return %arg0, %arg1, %arg3 : i32, i32, i32
  }
  func.func @transform_2(%arg0: i32, %arg1: i32, %arg2: i32, %arg3: i32) -> (i32, i32, i32) {
    %c0_i32 = arith.constant 0 : i32
    return %arg0, %arg1, %arg2 : i32, i32, i32
  }
}

</mosaic_0001>

<llo_original>
// kernel: tpu_custom_call.1
$region0: #{tpu_custom_call.1}
  #allocation0 [shape = 'u32[]', space=smem, size = 0x4, offset = 0x4, fixed_abs, tag = 'smem constant byte address 0x4 - core index']
  #allocation1 [shape = 'u32[144,128]{1,0:T(1,128)}', space=vmem, size = 0x12000, scoped, tag = 'internal scratch']
  #allocation2 [shape = 'f32[2,8,32]{2,1,0:T(8,128)}', space=vmem, size = 0x2000, scoped, tag = 'scratch operand']
  %s0 = inlined_call_operand.hbm [shape: f32[2,8,8,32], index: 0, kind: input, shape index: {}]
  %s1 = inlined_call_operand.hbm [shape: f32[2,8,8], index: 1, kind: input, shape index: {}]
  %s2 = inlined_call_operand.hbm [shape: f32[2,8,32], index: 2, kind: output, shape index: {}]
  %s3 = sld [smem:[#allocation0]]
  $region34: #{tpu_custom_call.1} parent=0
    _
  %s5 = ssub.s32 1, %s3
  %s6 = scalar_select 0, %s5, %s3
  $region1: #{tpu_custom_call.1} parent=0
    #allocation3 [shape = 'u8[65536]{0}', space=vmem, size = 0x10000, scoped, tag = 'input window, operand 0, single buffered']
    #allocation4 [shape = 's32[1]{0}', space=sflag, size = 0x4, scoped, tag = 'scoped memory for tpu_custom_call.1']
    #allocation5 [shape = 's32[1]{0}', space=sflag, size = 0x4, scoped, tag = 'scoped memory for tpu_custom_call.1']
    #allocation6 [shape = 'u8[8192]{0}', space=vmem, size = 0x2000, scoped, tag = 'input window, operand 1, single buffered']
    #allocation7 [shape = 's32[1]{0}', space=sflag, size = 0x4, scoped, tag = 'scoped memory for tpu_custom_call.1']
    #allocation8 [shape = 'u8[8192]{0}', space=vmem, size = 0x2000, scoped, tag = 'output window, operand 0, single buffered']
    %7 = vsyncpa [#allocation4], 0
    %8 = vsyncpa [#allocation7], 0
    %9 = vsyncpa [#allocation5], 0
    // Predicated region
    $region2: #{tpu_custom_call.1} parent=1 // pred_check
      _
    $region3: #{tpu_custom_call.1} parent=1 // pred_check_branch
      %11 = sbr.rel (0) target = $region5
    $region4: #{tpu_custom_call.1} parent=1 // pred_region
      %s13 = ssub.s32 2048, 2048
      %14 = vsyncadd [#allocation4], %s13
      %s15 = sshll.u32 [#allocation3], 4
      %s16 = int_to_ptr.vmem [resolvable:$true] %s15
      %21 = dma.hbm_to_vmem [thread:$0]  %s0, 2048, %s16, [#allocation4], 128, 128, 8
    $region5: #{tpu_custom_call.1} parent=1 // pred_fallthru
      _
    // Predicated region
    $region6: #{tpu_custom_call.1} parent=1 // pred_check
      _
    $region7: #{tpu_custom_call.1} parent=1 // pred_check_branch
      %23 = sbr.rel (0) target = $region9
    $region8: #{tpu_custom_call.1} parent=1 // pred_region
      %s25 = ssub.s32 256, 256
      %26 = vsyncadd [#allocation7], %s25
      %s27 = sshll.u32 [#allocation6], 4
      %s28 = int_to_ptr.vmem [resolvable:$true] %s27
      %33 = dma.hbm_to_vmem [thread:$0]  %s1, 256, %s28, [#allocation7], 128, 128, 8
    $region9: #{tpu_custom_call.1} parent=1 // pred_fallthru
      _
    // Predicated region
    $region10: #{tpu_custom_call.1} parent=1 // pred_check
      _
    $region11: #{tpu_custom_call.1} parent=1 // pred_check_branch
      %35 = sbr.rel (0) target = $region13
    $region12: #{tpu_custom_call.1} parent=1 // pred_region
      %36 = dma.done [#allocation4], 2048
    $region13: #{tpu_custom_call.1} parent=1 // pred_fallthru
      _
    // Predicated region
    $region14: #{tpu_custom_call.1} parent=1 // pred_check
      _
    $region15: #{tpu_custom_call.1} parent=1 // pred_check_branch
      %38 = sbr.rel (0) target = $region17
    $region16: #{tpu_custom_call.1} parent=1 // pred_region
      %39 = dma.done [#allocation7], 256
    $region17: #{tpu_custom_call.1} parent=1 // pred_fallthru
      _
    %p40 = scmp.eq.s32.totalorder 0, 0
    // Predicated region
    $region18: #{tpu_custom_call.1} parent=1 // pred_check
      %p41 = pneg %p40
    $region19: #{tpu_custom_call.1} parent=1 // pred_check_branch
      %43 = sbr.rel (%p41) target = $region21
    $region20: #{tpu_custom_call.1} parent=1 // pred_region
      %vm44 = vcmask 261120
      %45 = vst.msk [vmem:[#allocation2] sm:$0xff] %vm44, 0.0
      %46 = vst.msk [vmem:[#allocation2 + $0x8] sm:$0xff] %vm44, 0.0
    $region21: #{tpu_custom_call.1} parent=1 // pred_fallthru
      _
    %v47 = vld [vmem:[#allocation3] sm:$0xff]
    %v48 = vld [vmem:[#allocation3 + $0x8] sm:$0xff]
    %v49 = vld [vmem:[#allocation3 + $0x10] sm:$0xff]
    %v50 = vld [vmem:[#allocation3 + $0x18] sm:$0xff]
    %v51 = vld [vmem:[#allocation3 + $0x20] sm:$0xff]
    %v52 = vld [vmem:[#allocation3 + $0x28] sm:$0xff]
    %v53 = vld [vmem:[#allocation3 + $0x30] sm:$0xff]
    %v54 = vld [vmem:[#allocation3 + $0x38] sm:$0xff]
    %v55 = vld [vmem:[#allocation3 + $0x40] sm:$0xff]
    %v56 = vld [vmem:[#allocation3 + $0x48] sm:$0xff]
    %v57 = vld [vmem:[#allocation3 + $0x50] sm:$0xff]
    %v58 = vld [vmem:[#allocation3 + $0x58] sm:$0xff]
    %v59 = vld [vmem:[#allocation3 + $0x60] sm:$0xff]
    %v60 = vld [vmem:[#allocation3 + $0x68] sm:$0xff]
    %v61 = vld [vmem:[#allocation3 + $0x70] sm:$0xff]
    %v62 = vld [vmem:[#allocation3 + $0x78] sm:$0xff]
    %v63 = vld [vmem:[#allocation6] sm:$0xff]
    %v64 = vld [vmem:[#allocation6 + $0x8] sm:$0xff]
    %v65 = vld [vmem:[#allocation2] sm:$0xff]
    %v66 = vld [vmem:[#allocation2 + $0x8] sm:$0xff]
    %v67 = vlaneseq
    %v68 = vshrl.u32 %v67, 7
    %v69 = vsub.s32 0, %v68
    %v70 = vrot.slane %v63, %v69
    %72 = vbcast.lane.b32.xlu0 %v70, 256
    %v73 = vpop.permute.xlu0 %72
    %v74 = vlaneseq
    %v75 = vshrl.u32 %v74, 7
    %v76 = vsub.s32 1, %v75
    %v77 = vrot.slane %v63, %v76
    %79 = vbcast.lane.b32.xlu0 %v77, 256
    %v80 = vpop.permute.xlu0 %79
    %v81 = vlaneseq
    %v82 = vshrl.u32 %v81, 7
    %v83 = vsub.s32 2, %v82
    %v84 = vrot.slane %v63, %v83
    %86 = vbcast.lane.b32.xlu0 %v84, 256
    %v87 = vpop.permute.xlu0 %86
    %v88 = vlaneseq
    %v89 = vshrl.u32 %v88, 7
    %v90 = vsub.s32 3, %v89
    %v91 = vrot.slane %v63, %v90
    %93 = vbcast.lane.b32.xlu0 %v91, 256
    %v94 = vpop.permute.xlu0 %93
    %v95 = vlaneseq
    %v96 = vshrl.u32 %v95, 7
    %v97 = vsub.s32 4, %v96
    %v98 = vrot.slane %v63, %v97
    %100 = vbcast.lane.b32.xlu0 %v98, 256
    %v101 = vpop.permute.xlu0 %100
    %v102 = vlaneseq
    %v103 = vshrl.u32 %v102, 7
    %v104 = vsub.s32 5, %v103
    %v105 = vrot.slane %v63, %v104
    %107 = vbcast.lane.b32.xlu0 %v105, 256
    %v108 = vpop.permute.xlu0 %107
    %v109 = vlaneseq
    %v110 = vshrl.u32 %v109, 7
    %v111 = vsub.s32 6, %v110
    %v112 = vrot.slane %v63, %v111
    %114 = vbcast.lane.b32.xlu0 %v112, 256
    %v115 = vpop.permute.xlu0 %114
    %v116 = vlaneseq
    %v117 = vshrl.u32 %v116, 7
    %v118 = vsub.s32 7, %v117
    %v119 = vrot.slane %v63, %v118
    %121 = vbcast.lane.b32.xlu0 %v119, 256
    %v122 = vpop.permute.xlu0 %121
    %v123 = vlaneseq
    %v124 = vshrl.u32 %v123, 7
    %v125 = vsub.s32 0, %v124
    %v126 = vrot.slane %v64, %v125
    %128 = vbcast.lane.b32.xlu0 %v126, 256
    %v129 = vpop.permute.xlu0 %128
    %v130 = vlaneseq
    %v131 = vshrl.u32 %v130, 7
    %v132 = vsub.s32 1, %v131
    %v133 = vrot.slane %v64, %v132
    %135 = vbcast.lane.b32.xlu0 %v133, 256
    %v136 = vpop.permute.xlu0 %135
    %v137 = vlaneseq
    %v138 = vshrl.u32 %v137, 7
    %v139 = vsub.s32 2, %v138
    %v140 = vrot.slane %v64, %v139
    %142 = vbcast.lane.b32.xlu0 %v140, 256
    %v143 = vpop.permute.xlu0 %142
    %v144 = vlaneseq
    %v145 = vshrl.u32 %v144, 7
    %v146 = vsub.s32 3, %v145
    %v147 = vrot.slane %v64, %v146
    %149 = vbcast.lane.b32.xlu0 %v147, 256
    %v150 = vpop.permute.xlu0 %149
    %v151 = vlaneseq
    %v152 = vshrl.u32 %v151, 7
    %v153 = vsub.s32 4, %v152
    %v154 = vrot.slane %v64, %v153
    %156 = vbcast.lane.b32.xlu0 %v154, 256
    %v157 = vpop.permute.xlu0 %156
    %v158 = vlaneseq
    %v159 = vshrl.u32 %v158, 7
    %v160 = vsub.s32 5, %v159
    %v161 = vrot.slane %v64, %v160
    %163 = vbcast.lane.b32.xlu0 %v161, 256
    %v164 = vpop.permute.xlu0 %163
    %v165 = vlaneseq
    %v166 = vshrl.u32 %v165, 7
    %v167 = vsub.s32 6, %v166
    %v168 = vrot.slane %v64, %v167
    %170 = vbcast.lane.b32.xlu0 %v168, 256
    %v171 = vpop.permute.xlu0 %170
    %v172 = vlaneseq
    %v173 = vshrl.u32 %v172, 7
    %v174 = vsub.s32 7, %v173
    %v175 = vrot.slane %v64, %v174
    %177 = vbcast.lane.b32.xlu0 %v175, 256
    %v178 = vpop.permute.xlu0 %177
    %v179 = vmul.f32 %v47, %v73
    %v180 = vmul.f32 %v48, %v80
    %v181 = vmul.f32 %v49, %v87
    %v182 = vmul.f32 %v50, %v94
    %v183 = vmul.f32 %v51, %v101
    %v184 = vmul.f32 %v52, %v108
    %v185 = vmul.f32 %v53, %v115
    %v186 = vmul.f32 %v54, %v122
    %v187 = vmul.f32 %v55, %v129
    %v188 = vmul.f32 %v56, %v136
    %v189 = vmul.f32 %v57, %v143
    %v190 = vmul.f32 %v58, %v150
    %v191 = vmul.f32 %v59, %v157
    %v192 = vmul.f32 %v60, %v164
    %v193 = vmul.f32 %v61, %v171
    %v194 = vmul.f32 %v62, %v178
    %vm195 = vcmask 261120
    %v196 = vsel %vm195, %v179, 0.0
    %v197 = vrot.slane %v196, 4
    %v198 = vadd.f32 %v196, %v197
    %v199 = vrot.slane %v198, 2
    %v200 = vadd.f32 %v198, %v199
    %v201 = vrot.slane %v200, 1
    %v202 = vadd.f32 %v200, %v201
    %v203 = vsel %vm195, %v180, 0.0
    %v204 = vrot.slane %v203, 4
    %v205 = vadd.f32 %v203, %v204
    %v206 = vrot.slane %v205, 2
    %v207 = vadd.f32 %v205, %v206
    %v208 = vrot.slane %v207, 1
    %v209 = vadd.f32 %v207, %v208
    %v210 = vsel %vm195, %v181, 0.0
    %v211 = vrot.slane %v210, 4
    %v212 = vadd.f32 %v210, %v211
    %v213 = vrot.slane %v212, 2
    %v214 = vadd.f32 %v212, %v213
    %v215 = vrot.slane %v214, 1
    %v216 = vadd.f32 %v214, %v215
    %v217 = vsel %vm195, %v182, 0.0
    %v218 = vrot.slane %v217, 4
    %v219 = vadd.f32 %v217, %v218
    %v220 = vrot.slane %v219, 2
    %v221 = vadd.f32 %v219, %v220
    %v222 = vrot.slane %v221, 1
    %v223 = vadd.f32 %v221, %v222
    %v224 = vsel %vm195, %v183, 0.0
    %v225 = vrot.slane %v224, 4
    %v226 = vadd.f32 %v224, %v225
    %v227 = vrot.slane %v226, 2
    %v228 = vadd.f32 %v226, %v227
    %v229 = vrot.slane %v228, 1
    %v230 = vadd.f32 %v228, %v229
    %v231 = vsel %vm195, %v184, 0.0
    %v232 = vrot.slane %v231, 4
    %v233 = vadd.f32 %v231, %v232
    %v234 = vrot.slane %v233, 2
    %v235 = vadd.f32 %v233, %v234
    %v236 = vrot.slane %v235, 1
    %v237 = vadd.f32 %v235, %v236
    %v238 = vsel %vm195, %v185, 0.0
    %v239 = vrot.slane %v238, 4
    %v240 = vadd.f32 %v238, %v239
    %v241 = vrot.slane %v240, 2
    %v242 = vadd.f32 %v240, %v241
    %v243 = vrot.slane %v242, 1
    %v244 = vadd.f32 %v242, %v243
    %v245 = vsel %vm195, %v186, 0.0
    %v246 = vrot.slane %v245, 4
    %v247 = vadd.f32 %v245, %v246
    %v248 = vrot.slane %v247, 2
    %v249 = vadd.f32 %v247, %v248
    %v250 = vrot.slane %v249, 1
    %v251 = vadd.f32 %v249, %v250
    %v252 = vsel %vm195, %v187, 0.0
    %v253 = vrot.slane %v252, 4
    %v254 = vadd.f32 %v252, %v253
    %v255 = vrot.slane %v254, 2
    %v256 = vadd.f32 %v254, %v255
    %v257 = vrot.slane %v256, 1
    %v258 = vadd.f32 %v256, %v257
    %v259 = vsel %vm195, %v188, 0.0
    %v260 = vrot.slane %v259, 4
    %v261 = vadd.f32 %v259, %v260
    %v262 = vrot.slane %v261, 2
    %v263 = vadd.f32 %v261, %v262
    %v264 = vrot.slane %v263, 1
    %v265 = vadd.f32 %v263, %v264
    %v266 = vsel %vm195, %v189, 0.0
    %v267 = vrot.slane %v266, 4
    %v268 = vadd.f32 %v266, %v267
    %v269 = vrot.slane %v268, 2
    %v270 = vadd.f32 %v268, %v269
    %v271 = vrot.slane %v270, 1
    %v272 = vadd.f32 %v270, %v271
    %v273 = vsel %vm195, %v190, 0.0
    %v274 = vrot.slane %v273, 4
    %v275 = vadd.f32 %v273, %v274
    %v276 = vrot.slane %v275, 2
    %v277 = vadd.f32 %v275, %v276
    %v278 = vrot.slane %v277, 1
    %v279 = vadd.f32 %v277, %v278
    %v280 = vsel %vm195, %v191, 0.0
    %v281 = vrot.slane %v280, 4
    %v282 = vadd.f32 %v280, %v281
    %v283 = vrot.slane %v282, 2
    %v284 = vadd.f32 %v282, %v283
    %v285 = vrot.slane %v284, 1
    %v286 = vadd.f32 %v284, %v285
    %v287 = vsel %vm195, %v192, 0.0
    %v288 = vrot.slane %v287, 4
    %v289 = vadd.f32 %v287, %v288
    %v290 = vrot.slane %v289, 2
    %v291 = vadd.f32 %v289, %v290
    %v292 = vrot.slane %v291, 1
    %v293 = vadd.f32 %v291, %v292
    %v294 = vsel %vm195, %v193, 0.0
    %v295 = vrot.slane %v294, 4
    %v296 = vadd.f32 %v294, %v295
    %v297 = vrot.slane %v296, 2
    %v298 = vadd.f32 %v296, %v297
    %v299 = vrot.slane %v298, 1
    %v300 = vadd.f32 %v298, %v299
    %v301 = vsel %vm195, %v194, 0.0
    %v302 = vrot.slane %v301, 4
    %v303 = vadd.f32 %v301, %v302
    %v304 = vrot.slane %v303, 2
    %v305 = vadd.f32 %v303, %v304
    %v306 = vrot.slane %v305, 1
    %v307 = vadd.f32 %v305, %v306
    %vm324 = vcmask 1041409
    %v325 = vsel %vm324, %v209, %v202
    %vm326 = vcmask 1042434
    %v327 = vsel %vm326, %v216, %v325
    %vm328 = vcmask 1043459
    %v329 = vsel %vm328, %v223, %v327
    %vm330 = vcmask 1044484
    %v331 = vsel %vm330, %v230, %v329
    %vm332 = vcmask 1045509
    %v333 = vsel %vm332, %v237, %v331
    %vm334 = vcmask 1046534
    %v335 = vsel %vm334, %v244, %v333
    %vm336 = vcmask 1047559
    %v337 = vsel %vm336, %v251, %v335
    %v338 = vsel %vm324, %v265, %v258
    %v339 = vsel %vm326, %v272, %v338
    %v340 = vsel %vm328, %v279, %v339
    %v341 = vsel %vm330, %v286, %v340
    %v342 = vsel %vm332, %v293, %v341
    %v343 = vsel %vm334, %v300, %v342
    %v344 = vsel %vm336, %v307, %v343
    %v347 = vadd.f32 %v65, %v337
    %v348 = vadd.f32 %v66, %v344
    %349 = vst.msk [vmem:[#allocation2] sm:$0xff] %vm195, %v347
    %350 = vst.msk [vmem:[#allocation2 + $0x8] sm:$0xff] %vm195, %v348
    // Predicated region
    $region22: #{tpu_custom_call.1} parent=1 // pred_check
      %p351 = pneg %p40
    $region23: #{tpu_custom_call.1} parent=1 // pred_check_branch
      %353 = sbr.rel (%p351) target = $region25
    $region24: #{tpu_custom_call.1} parent=1 // pred_region
      %v354 = vld [vmem:[#allocation2] sm:$0xff]
      %v355 = vld [vmem:[#allocation2 + $0x8] sm:$0xff]
      %356 = vst.msk [vmem:[#allocation8] sm:$0xff] %vm195, %v354
      %357 = vst.msk [vmem:[#allocation8 + $0x8] sm:$0xff] %vm195, %v355
    $region25: #{tpu_custom_call.1} parent=1 // pred_fallthru
      _
    // Predicated region
    $region26: #{tpu_custom_call.1} parent=1 // pred_check
      _
    $region27: #{tpu_custom_call.1} parent=1 // pred_check_branch
      %359 = sbr.rel (0) target = $region29
    $region28: #{tpu_custom_call.1} parent=1 // pred_region
      %s361 = ssub.s32 256, 256
      %362 = vsyncadd [#allocation5], %s361
      %s363 = sshll.u32 [#allocation8], 4
      %s364 = int_to_ptr.vmem [resolvable:$true] %s363
      %369 = dma.vmem_to_hbm [thread:$0]  %s364, 256, %s2, [#allocation5], 128, 128, 8
    $region29: #{tpu_custom_call.1} parent=1 // pred_fallthru
      _
    // Predicated region
    $region30: #{tpu_custom_call.1} parent=1 // pred_check
      _
    $region31: #{tpu_custom_call.1} parent=1 // pred_check_branch
      %371 = sbr.rel (0) target = $region33
    $region32: #{tpu_custom_call.1} parent=1 // pred_region
      %372 = dma.done [#allocation5], 256
    $region33: #{tpu_custom_call.1} parent=1 // pred_fallthru
      _
    %373 = vsyncpa [#allocation4], 1
    %374 = vsyncpa [#allocation7], 1
    %375 = vsyncpa [#allocation5], 1

</llo_original>
